<compile_context>
chip_gen: v6e
topology: v6e:2x2x1
jax: 0.10.0
libtpu: 0.0.40
codegen_flags: <defaults>
</compile_context>

<pallas_src>
import jax
import jax.numpy as jnp
from jax.experimental import pallas as pl
from jax.experimental.pallas import tpu as pltpu


_TARGET_STEP_BYTES = 8 << 20  # ~8 MiB of HBM traffic per grid step (good on v5e/v6e/v7x)


def _round_up(x, m):
    return ((x + m - 1) // m) * m


def _dequantize_kernel(ma_ref, x_ref, o_ref):
    # ma_ref: (rows, 2) f32 per-channel [mul, add] table. Its block index only
    #         depends on the row-grid axis, so it is not re-fetched while the
    #         inner lane-axis loop runs.
    # x_ref : (rows, cols) tile of quantized codes in their native dtype.
    # o_ref : (rows, cols) output tile.
    x = x_ref[...].astype(jnp.float32)
    mul = ma_ref[:, 0:1]  # (rows, 1), broadcast across lanes
    add = ma_ref[:, 1:2]
    o_ref[...] = (x * mul + add).astype(o_ref.dtype)


def _pick_blocks(n_rows, n_cols, in_itemsize, target_bytes=_TARGET_STEP_BYTES):
    """Pick a (rows, cols) block for a (n_rows, n_cols) array.

    cols is a multiple of 128 (unmasked lane-dense stores), rows a multiple of 8
    (sublane tile); both are capped at the full dims. The product keeps per-step
    HBM traffic (native-dtype read + f32 write) near target_bytes so the fixed
    per-grid-step overhead is amortized, while double-buffered VMEM stays
    bounded at ~2 * target_bytes regardless of H*W.
    """
    bpe = in_itemsize + 4  # read + f32 write bytes per element
    # Lane block first: as wide as the budget allows assuming the 8-row minimum.
    cols = max(128, (target_bytes // (8 * bpe)) // 128 * 128)
    cols = min(cols, n_cols)
    # Row block fills the remaining budget.
    rows = max(8, target_bytes // (cols * bpe))
    if rows >= n_rows:
        rows = n_rows
    else:
        rows = max(8, rows // 8 * 8)
    return rows, cols


def dequantize(quantized_x, per_channel_min, per_channel_max, per_channel_num_bits,
               *, out_dtype=jnp.float32):
    """quantized_x: (B, C, H, W); per-channel tensors: (B, C). Returns (B, C, H, W)."""
    B, C, H, W = quantized_x.shape
    N = B * C
    L = H * W

    # Lane-dense flattened view: one row per (batch, channel), H*W along lanes.
    # Pure reshape of a contiguous array -> no data movement, no dtype cast.
    x2 = quantized_x.reshape(N, L)

    # Guarantee a 128-aligned lane dimension -> unmasked vector stores.
    L_pad = _round_up(L, 128)
    if L_pad != L:
        x2 = jnp.pad(x2, ((0, 0), (0, L_pad - L)))

    # Fold the per-channel scalar math into one tiny (N, 2) f32 [mul, add] table.
    cmin = per_channel_min.reshape(N).astype(jnp.float32)
    cmax = per_channel_max.reshape(N).astype(jnp.float32)
    nbits = per_channel_num_bits.reshape(N).astype(jnp.float32)
    qrange = jnp.exp2(nbits) - 1.0  # NOTE: inf/NaN if nbits == 0 (matches reference)
    mul = (cmax - cmin) / qrange
    ma = jnp.stack([mul, cmin], axis=1)  # (N, 2)

    in_itemsize = jnp.dtype(quantized_x.dtype).itemsize
    rows, cols = _pick_blocks(N, L_pad, in_itemsize)
    grid = (pl.cdiv(N, rows), pl.cdiv(L_pad, cols))

    # VMEM budget derived from the actual footprint: double-buffered input +
    # output blocks plus the (lane-padded) table block and some slack; capped
    # well under v7x's 32 MiB scoped default.
    block_bytes = rows * cols * (in_itemsize + 4)
    table_bytes = _round_up(rows, 8) * 128 * 4
    vmem_limit = min(max(2 * (block_bytes + table_bytes) + (2 << 20), 8 << 20), 30 << 20)

    out = pl.pallas_call(
        _dequantize_kernel,
        out_shape=jax.ShapeDtypeStruct((N, L_pad), out_dtype),
        grid=grid,
        in_specs=[
            pl.BlockSpec((rows, 2), lambda i, j: (i, 0)),     # [mul, add] table
            pl.BlockSpec((rows, cols), lambda i, j: (i, j)),  # quantized codes
        ],
        out_specs=pl.BlockSpec((rows, cols), lambda i, j: (i, j)),
        compiler_params=pltpu.CompilerParams(
            dimension_semantics=("parallel", "parallel"),
            vmem_limit_bytes=vmem_limit,
        ),
    )(ma, x2)

    if L_pad != L:
        out = out[:, :L]
    return out.reshape(B, C, H, W)


def _reference(quantized_x, per_channel_min, per_channel_max, per_channel_num_bits):
    """Pure-JAX transcription of the PyTorch forward (same op order)."""
    B, C, H, W = quantized_x.shape
    exponents = per_channel_num_bits.reshape(B, C, 1, 1).astype(jnp.float32)
    qrange = jnp.power(2.0, exponents) - 1.0
    normalized = quantized_x.astype(jnp.float32) * (1.0 / qrange)
    scale = (per_channel_max - per_channel_min).reshape(B, C, 1, 1).astype(jnp.float32)
    cmin = per_channel_min.reshape(B, C, 1, 1).astype(jnp.float32)
    return normalized * scale + cmin


if __name__ == "__main__":
    key = jax.random.PRNGKey(0)
    k1, k2, k3 = jax.random.split(key, 3)

    B, C, H, W = 2, 4, 16, 16

    # Synthetic "Quantize" outputs: integer codes in [0, 2^nbits - 1],
    # per-channel min/max ranges, per-channel bit widths (varying 4..8 bits).
    nbits = (4.0 + (jnp.arange(B * C, dtype=jnp.float32) % 5.0)).reshape(B, C)
    cmin = jax.random.uniform(k1, (B, C), jnp.float32, minval=-2.0, maxval=0.0)
    cmax = cmin + jax.random.uniform(k2, (B, C), jnp.float32, minval=0.5, maxval=3.0)
    codes = jnp.floor(
        jax.random.uniform(k3, (B, C, H, W), jnp.float32, minval=0.0, maxval=15.999)
    )

    out = dequantize(codes, cmin, cmax, nbits)
    out = jax.block_until_ready(out)

    ref = _reference(codes, cmin, cmax, nbits)
    assert out.shape == (B, C, H, W)
    assert out.dtype == jnp.float32
    assert jnp.allclose(out, ref, atol=1e-5, rtol=1e-5), "mismatch vs reference"

    print("KERNEL_OK")
</pallas_src>

<mosaic_0001>
module attributes {stable_mosaic.version = 11 : i64} {
  func.func @_dequantize_kernel(%arg0: i32, %arg1: i32, %arg2: memref<8x2xf32, #tpu.memory_space<vmem>>, %arg3: memref<8x256xf32, #tpu.memory_space<vmem>>, %arg4: memref<8x256xf32, #tpu.memory_space<vmem>>) attributes {dimension_semantics = [#tpu.dimension_semantics<parallel>, #tpu.dimension_semantics<parallel>], iteration_bounds = array<i64: 1, 1>, scalar_prefetch = 0 : i64, scratch_operands = 0 : i64, tpu.core_type = #tpu.core_type<tc>, window_params = [{transform_indices = @transform_0, window_bounds = array<i64: 8, 2>}, {transform_indices = @transform_1, window_bounds = array<i64: 8, 256>}, {transform_indices = @transform_2, window_bounds = array<i64: 8, 256>}]} {
    %c0 = arith.constant 0 : index
    %c0_0 = arith.constant 0 : index
    %0 = vector.load %arg3[%c0, %c0_0] : memref<8x256xf32, #tpu.memory_space<vmem>>, vector<8x256xf32>
    %c0_1 = arith.constant 0 : index
    %c0_2 = arith.constant 0 : index
    %1 = vector.load %arg2[%c0_1, %c0_2] : memref<8x2xf32, #tpu.memory_space<vmem>>, vector<8x1xf32>
    %c0_3 = arith.constant 0 : index
    %c1 = arith.constant 1 : index
    %2 = vector.load %arg2[%c0_3, %c1] : memref<8x2xf32, #tpu.memory_space<vmem>>, vector<8x1xf32>
    %3 = vector.broadcast %1 : vector<8x1xf32> to vector<8x256xf32>
    %4 = arith.mulf %0, %3 : vector<8x256xf32>
    %5 = vector.broadcast %2 : vector<8x1xf32> to vector<8x256xf32>
    %6 = arith.addf %4, %5 : vector<8x256xf32>
    %c0_4 = arith.constant 0 : index
    %c0_5 = arith.constant 0 : index
    %7 = vector.load %arg4[%c0_4, %c0_5] : memref<8x256xf32, #tpu.memory_space<vmem>>, vector<8x256xf32>
    tpu.vector_store %arg4[%c0_4, %c0_5], %6 {strides = array<i32>} : memref<8x256xf32, #tpu.memory_space<vmem>>, vector<8x256xf32>,
    return
  }
  func.func @transform_0(%arg0: i32, %arg1: i32) -> (i32, i32) {
    %c0_i32 = arith.constant 0 : i32
    %c0_i32_0 = arith.constant 0 : i32
    return %arg0, %c0_i32 : i32, i32
  }
  func.func @transform_1(%arg0: i32, %arg1: i32) -> (i32, i32) {
    %c0_i32 = arith.constant 0 : i32
    return %arg0, %arg1 : i32, i32
  }
  func.func @transform_2(%arg0: i32, %arg1: i32) -> (i32, i32) {
    %c0_i32 = arith.constant 0 : i32
    return %arg0, %arg1 : i32, i32
  }
}

</mosaic_0001>

<llo_original>
// kernel: tpu_custom_call.1
$region0: #{tpu_custom_call.1}
  #allocation0 [shape = 'u32[]', space=smem, size = 0x4, offset = 0x4, fixed_abs, tag = 'smem constant byte address 0x4 - core index']
  #allocation1 [shape = 'u32[144,128]{1,0:T(1,128)}', space=vmem, size = 0x12000, scoped, tag = 'internal scratch']
  %s0 = inlined_call_operand.vmem [shape: f32[8,2], index: 0, kind: input, shape index: {}]
  %s1 = inlined_call_operand.hbm [shape: f32[8,256], index: 1, kind: input, shape index: {}]
  %s2 = inlined_call_operand.hbm [shape: f32[8,256], index: 2, kind: output, shape index: {}]
  %s3 = sld [smem:[#allocation0]]
  $region22: #{tpu_custom_call.1} parent=0
    _
  %s5 = ssub.s32 1, %s3
  %s6 = scalar_select 0, %s5, %s3
  $region1: #{tpu_custom_call.1} parent=0
    #allocation2 [shape = 'u8[8192]{0}', space=vmem, size = 0x2000, scoped, tag = 'input window, operand 1, single buffered']
    #allocation3 [shape = 's32[1]{0}', space=sflag, size = 0x4, scoped, tag = 'scoped memory for tpu_custom_call.1']
    #allocation4 [shape = 's32[1]{0}', space=sflag, size = 0x4, scoped, tag = 'scoped memory for tpu_custom_call.1']
    #allocation5 [shape = 'u8[8192]{0}', space=vmem, size = 0x2000, scoped, tag = 'output window, operand 0, single buffered']
    %7 = vsyncpa [#allocation3], 0
    %8 = vsyncpa [#allocation4], 0
    // Predicated region
    $region2: #{tpu_custom_call.1} parent=1 // pred_check
      _
    $region3: #{tpu_custom_call.1} parent=1 // pred_check_branch
      %10 = sbr.rel (0) target = $region5
    $region4: #{tpu_custom_call.1} parent=1 // pred_region
      _
    $region5: #{tpu_custom_call.1} parent=1 // pred_fallthru
      _
    // Predicated region
    $region6: #{tpu_custom_call.1} parent=1 // pred_check
      _
    $region7: #{tpu_custom_call.1} parent=1 // pred_check_branch
      %12 = sbr.rel (0) target = $region9
    $region8: #{tpu_custom_call.1} parent=1 // pred_region
      %s14 = ssub.s32 256, 256
      %15 = vsyncadd [#allocation3], %s14
      %s17 = sshll.u32 [#allocation2], 4
      %s18 = int_to_ptr.vmem [resolvable:$true] %s17
      %20 = dma.hbm_to_vmem [thread:$0]  %s1, 256, %s18, [#allocation3]
    $region9: #{tpu_custom_call.1} parent=1 // pred_fallthru
      _
    // Predicated region
    $region10: #{tpu_custom_call.1} parent=1 // pred_check
      _
    $region11: #{tpu_custom_call.1} parent=1 // pred_check_branch
      %22 = sbr.rel (0) target = $region13
    $region12: #{tpu_custom_call.1} parent=1 // pred_region
      %23 = dma.done [#allocation3], 256
    $region13: #{tpu_custom_call.1} parent=1 // pred_fallthru
      _
    %v24 = vld [vmem:[#allocation2] sm:$0xff]
    %v25 = vld [vmem:[#allocation2 + $0x8] sm:$0xff]
    %v26 = vld [vmem:[%s0] sm:$0xff]
    %28 = vset.pattern.permute.xlu0 0
    %29 = vperm.xlu0 %28, %v26
    %v30 = vpop.permute.xlu0 %29
    %v32 = vmul.f32 %v24, %v30
    %v33 = vmul.f32 %v25, %v30
    %34 = vset.pattern.permute.xlu0 1
    %35 = vperm.xlu0 %34, %v26
    %v36 = vpop.permute.xlu0 %35
    %v38 = vadd.f32 %v32, %v36
    %v39 = vadd.f32 %v33, %v36
    %40 = vst [vmem:[#allocation5] sm:$0xff] %v38
    %41 = vst [vmem:[#allocation5 + $0x8] sm:$0xff] %v39
    // Predicated region
    $region14: #{tpu_custom_call.1} parent=1 // pred_check
      _
    $region15: #{tpu_custom_call.1} parent=1 // pred_check_branch
      %43 = sbr.rel (0) target = $region17
    $region16: #{tpu_custom_call.1} parent=1 // pred_region
      %s45 = ssub.s32 256, 256
      %46 = vsyncadd [#allocation4], %s45
      %s48 = sshll.u32 [#allocation5], 4
      %s49 = int_to_ptr.vmem [resolvable:$true] %s48
      %51 = dma.vmem_to_hbm [thread:$0]  %s49, 256, %s2, [#allocation4]
    $region17: #{tpu_custom_call.1} parent=1 // pred_fallthru
      _
    // Predicated region
    $region18: #{tpu_custom_call.1} parent=1 // pred_check
      _
    $region19: #{tpu_custom_call.1} parent=1 // pred_check_branch
      %53 = sbr.rel (0) target = $region21
    $region20: #{tpu_custom_call.1} parent=1 // pred_region
      %54 = dma.done [#allocation4], 256
    $region21: #{tpu_custom_call.1} parent=1 // pred_fallthru
      _
    %55 = vsyncpa [#allocation3], 1
    %56 = vsyncpa [#allocation4], 1

</llo_original>
